<compile_context>
chip_gen: v7x
topology: tpu7x:2x2x1
jax: 0.10.0
libtpu: 0.0.40
codegen_flags: <defaults>
</compile_context>

<pallas_src>
import functools

import jax
import jax.numpy as jnp
import numpy as np
from jax.experimental import pallas as pl
from jax.experimental.pallas import tpu as pltpu

PAD_IDX = 0
VMEM_LIMIT_BYTES = 32 * 1024 * 1024  # raises v5e's 16 MiB scoped default, safe on v7x


def _round_up(x, m):
    return -(-x // m) * m


def _pad_rows(x, n_to):
    pad = n_to - x.shape[0]
    if pad == 0:
        return x
    return jnp.pad(x, ((0, pad),) + ((0, 0),) * (x.ndim - 1))


def _pick_t_chunk(T, B, E, budget_bytes=8 << 20):
    """Largest divisor of T whose double-buffered gx+out tiles fit the budget,
    preferring >= 2 chunks so DMA overlaps the recurrence."""
    per_t = 2 * (B * 4 * E + B * E) * 4  # double-buffered f32 gx + out per step
    cap = max(1, budget_bytes // per_t)
    best = 1
    for d in range(1, T + 1):
        if T % d:
            continue
        if d > cap:
            break
        if T // d >= 2 or T == 1:
            best = d
    return best


# ----------------------------------------------------------------------------
# LSTM recurrence kernel.
#   gx_ref : (TC, B, 4E)  precomputed x @ W_ih^T + (b_ih + b_hh), gate order i,f,g,o
#   whh_ref: (E, 4E)      W_hh^T (bf16), all four gates fused column-wise
#   out_ref: (TC, B, E)   hidden states; h/c carried in VMEM scratch across chunks
# ----------------------------------------------------------------------------
def _lstm_kernel(gx_ref, whh_ref, out_ref, h_ref, c_ref, *, e):
    @pl.when(pl.program_id(0) == 0)
    def _():
        h_ref[...] = jnp.zeros_like(h_ref)
        c_ref[...] = jnp.zeros_like(c_ref)

    t_chunk = gx_ref.shape[0]
    whh = whh_ref[...]  # (E, 4E) bf16, loop-invariant — load once per chunk
    # TODO(synk): hold W_hh MXU-stationary across the loop via
    # pltpu.matmul_push_rhs / matmul_acc_lhs / matmul_pop to drop the per-step
    # weight push entirely.

    def step(t, carry):
        h, c = carry
        # One fused (B, E) @ (E, 4E) matmul per step (bf16 operands, f32 acc).
        z = gx_ref[t] + jnp.dot(h.astype(jnp.bfloat16), whh,
                                preferred_element_type=jnp.float32)   # (B, 4E)
        i = jax.nn.sigmoid(z[:, 0 * e:1 * e])
        f = jax.nn.sigmoid(z[:, 1 * e:2 * e])
        g = jnp.tanh(z[:, 2 * e:3 * e])
        o = jax.nn.sigmoid(z[:, 3 * e:4 * e])
        c_new = f * c + i * g
        h_new = o * jnp.tanh(c_new)
        out_ref[t] = h_new
        return h_new, c_new

    h, c = jax.lax.fori_loop(0, t_chunk, step, (h_ref[...], c_ref[...]),
                             unroll=min(t_chunk, 8))
    h_ref[...] = h
    c_ref[...] = c


def lstm_forward(gates_x, whh_all_bf16, *, t_chunk=None):
    T, B, four_e = gates_x.shape
    E = four_e // 4
    if t_chunk is None:
        t_chunk = _pick_t_chunk(T, B, E)
    assert T % t_chunk == 0
    n_chunks = T // t_chunk
    kernel = functools.partial(_lstm_kernel, e=E)
    # TODO(synk): on v7x, add a leading "parallel" batch-half grid axis (with
    # per-half h/c scratch) so both TensorCores run independent recurrences.
    return pl.pallas_call(
        kernel,
        out_shape=jax.ShapeDtypeStruct((T, B, E), jnp.float32),
        grid_spec=pltpu.PrefetchScalarGridSpec(
            num_scalar_prefetch=0,
            grid=(n_chunks,),
            in_specs=[
                pl.BlockSpec((t_chunk, B, 4 * E), lambda c: (c, 0, 0)),
                pl.BlockSpec((E, 4 * E), lambda c: (0, 0)),
            ],
            out_specs=pl.BlockSpec((t_chunk, B, E), lambda c: (c, 0, 0)),
            scratch_shapes=[
                pltpu.VMEM((B, E), jnp.float32),
                pltpu.VMEM((B, E), jnp.float32),
            ],
        ),
        compiler_params=pltpu.CompilerParams(
            dimension_semantics=("arbitrary",),
            vmem_limit_bytes=VMEM_LIMIT_BYTES),
    )(gates_x, whh_all_bf16)


# ----------------------------------------------------------------------------
# Fused negative-sampling loss + vocab-argmax kernel, tiled over N rows.
# Positive + negative samples arrive as one (TN, K+1, E) slab (pos = sample 0),
# so all sample scores come from one broadcast-multiply + one axis=-1 reduce.
# The vocab table stays VMEM-resident across row tiles; outputs are lane-dense.
# ----------------------------------------------------------------------------
def _loss_pred_kernel(hidden_ref, pn_ref, mask_ref, vocab_t_ref,
                      pred_ref, rowloss_ref, *, v_real, k_neg):
    h = hidden_ref[...]                                                  # (TN, E) f32
    m = mask_ref[...]                                                    # (TN, 1)
    pn = pn_ref[...]                                                     # (TN, K+1, E)
    tn = h.shape[0]

    # --- negative-sampling loss, stable softplus forms, pos fused into the pass ---
    scores_pn = jnp.sum(h[:, None, :] * pn, axis=-1)                     # (TN, K+1)
    pos_contrib = jnp.logaddexp(jnp.float32(0.0), -scores_pn[:, 0:1])    # -logsigmoid(s)
    neg_contrib = jnp.sum(jnp.logaddexp(jnp.float32(0.0), scores_pn[:, 1:]),
                          axis=-1, keepdims=True) / jnp.float32(k_neg)   # mean over K
    row_loss = m * (pos_contrib + neg_contrib)                           # (TN, 1)
    rowloss_ref[...] = row_loss[:, 0].reshape(1, 1, tn)                  # lane-dense

    # --- vocab scoring + first-occurrence argmax (padded vocab lanes masked) ---
    # TODO(synk): for very large V (v7x 64 MiB VMEM), tile the vocab axis as an
    # inner "arbitrary" grid dim with running max/argmax carried in scratch.
    scores = jnp.dot(h.astype(jnp.bfloat16), vocab_t_ref[...],
                     preferred_element_type=jnp.float32)                 # (TN, V_pad)
    col = jax.lax.broadcasted_iota(jnp.int32, scores.shape, 1)
    scores = jnp.where(col < v_real, scores, -jnp.inf)
    max_val = jnp.max(scores, axis=-1, keepdims=True)
    v_pad = scores.shape[-1]
    pred = jnp.min(jnp.where(scores == max_val, col, jnp.int32(v_pad)),
                   axis=-1)                                              # (TN,)
    pred_ref[...] = pred.reshape(1, 1, tn)


def loss_and_predict(hidden, pn_embedded, mask_f, vocab_t, *, v_real, tile_n=128):
    n_pad, e = hidden.shape
    kp1 = pn_embedded.shape[1]          # K + 1 (pos first)
    v_pad = vocab_t.shape[1]
    num_tiles = n_pad // tile_n
    kernel = functools.partial(_loss_pred_kernel, v_real=v_real, k_neg=kp1 - 1)
    return pl.pallas_call(
        kernel,
        out_shape=(
            jax.ShapeDtypeStruct((num_tiles, 1, tile_n), jnp.int32),     # predictions
            jax.ShapeDtypeStruct((num_tiles, 1, tile_n), jnp.float32),   # masked row loss
        ),
        grid_spec=pltpu.PrefetchScalarGridSpec(
            num_scalar_prefetch=0,
            grid=(num_tiles,),
            in_specs=[
                pl.BlockSpec((tile_n, e), lambda i: (i, 0)),
                pl.BlockSpec((tile_n, kp1, e), lambda i: (i, 0, 0)),
                pl.BlockSpec((tile_n, 1), lambda i: (i, 0)),
                pl.BlockSpec((e, v_pad), lambda i: (0, 0)),   # vocab resident across tiles
            ],
            out_specs=(
                pl.BlockSpec((1, 1, tile_n), lambda i: (i, 0, 0)),
                pl.BlockSpec((1, 1, tile_n), lambda i: (i, 0, 0)),
            ),
        ),
        compiler_params=pltpu.CompilerParams(
            dimension_semantics=("parallel",),
            vmem_limit_bytes=VMEM_LIMIT_BYTES),
    )(hidden, pn_embedded, mask_f, vocab_t)


# ----------------------------------------------------------------------------
# Parameter init (matches the PyTorch module's __init__, deterministic).
# ----------------------------------------------------------------------------
def init_params(key, vocab_size, embedding_dim):
    E = embedding_dim
    initrange = 0.5 / E
    k1, k2, k3, k4, k5, k6 = jax.random.split(key, 6)
    in_emb = jax.random.uniform(k1, (vocab_size, E), jnp.float32, -initrange, initrange)
    in_emb = in_emb.at[PAD_IDX].set(0.0)
    out_emb = jax.random.uniform(k2, (vocab_size, E), jnp.float32, -initrange, initrange)
    out_emb = out_emb.at[PAD_IDX].set(0.0)
    stdv = 1.0 / np.sqrt(E)
    w_ih = jax.random.uniform(k3, (4 * E, E), jnp.float32, -stdv, stdv)
    w_hh = jax.random.uniform(k4, (4 * E, E), jnp.float32, -stdv, stdv)
    b_ih = jax.random.uniform(k5, (4 * E,), jnp.float32, -stdv, stdv)
    b_hh = jax.random.uniform(k6, (4 * E,), jnp.float32, -stdv, stdv)
    return dict(in_emb=in_emb, out_emb=out_emb, w_ih=w_ih, w_hh=w_hh,
                b_ih=b_ih, b_hh=b_hh)


# ----------------------------------------------------------------------------
# Forward pass (XLA glue around the two Pallas kernels).
# ----------------------------------------------------------------------------
def forward(params, input_encoded, target_encoded, input_lengths, neg_samples,
            *, tile_n=128):
    B, T = input_encoded.shape
    V, E = params["in_emb"].shape
    K = neg_samples.shape[-1]
    N = B * T

    # in_embedding + dropout (eval-mode identity); gather stays in XLA.
    in_embedded = jnp.take(params["in_emb"], input_encoded, axis=0)      # (B, T, E)

    # Input projection hoisted out of the serial recurrence: one big MXU matmul,
    # produced directly in lane-dense (T, B, 4E) gate layout.
    # TODO(synk): if weights are reused across calls, precompute the (V, 4E)
    # projected-embedding table once and replace this matmul with a pure gather.
    bias = params["b_ih"] + params["b_hh"]                               # (4E,)
    gates_x = in_embedded.reshape(N, E) @ params["w_ih"].T + bias        # (N, 4E)
    gates_x = gates_x.reshape(B, T, 4 * E).transpose(1, 0, 2)            # (T, B, 4E)

    # Pad batch to a sublane multiple so the recurrence runs on full (8, *) tiles.
    B_pad = _round_up(B, 8)
    if B_pad != B:
        gates_x = jnp.pad(gates_x, ((0, 0), (0, B_pad - B), (0, 0)))

    # Fused recurrence weights: W_hh^T (E, 4E), bf16 MXU operand, f32 accumulation.
    whh_all = params["w_hh"].T.astype(jnp.bfloat16)

    lstm_out = lstm_forward(gates_x, whh_all)                            # (T, B_pad, E)
    lstm_out = jnp.transpose(lstm_out[:, :B, :], (1, 0, 2))              # (B, T, E)

    # pad_packed_sequence semantics: outputs past each sequence length are zero.
    valid = jnp.arange(T)[None, :] < input_lengths[:, None]
    lstm_out = lstm_out * valid[:, :, None].astype(lstm_out.dtype)

    hidden = lstm_out.reshape(N, E)                                      # (N, E)
    tgt_flat = target_encoded.reshape(-1)                                # (N,)
    # Positive target fused with negatives: one (N, K+1, E) gather, pos = sample 0.
    pn_idx = jnp.concatenate([tgt_flat[:, None], neg_samples.reshape(N, K)], axis=1)
    pn_embedded = jnp.take(params["out_emb"], pn_idx, axis=0)            # (N, K+1, E)
    mask = (input_encoded != PAD_IDX).reshape(-1)                        # (N,) bool
    mask_f = mask.astype(jnp.float32)[:, None]                           # (N, 1)

    # Pad N to the row-tile size (padded rows get mask 0) and V to a lane multiple.
    N_pad = _round_up(N, tile_n)
    hidden_p = _pad_rows(hidden, N_pad)
    pn_p = _pad_rows(pn_embedded, N_pad)
    mask_p = _pad_rows(mask_f, N_pad)

    V_pad = _round_up(V, 128)
    vocab_t = jnp.pad(params["out_emb"], ((0, V_pad - V), (0, 0))).T.astype(jnp.bfloat16)

    preds_tiles, rowloss_tiles = loss_and_predict(
        hidden_p, pn_p, mask_p, vocab_t, v_real=V, tile_n=tile_n)

    count = jnp.sum(mask_f)
    # Original masked_select(...).mean() would be NaN for an all-padding batch; guard.
    loss = jnp.sum(rowloss_tiles) / jnp.maximum(count, 1.0)
    preds = preds_tiles.reshape(-1)[:N]
    return loss, preds, tgt_flat, mask


if __name__ == "__main__":
    VOCAB, E, B, T, K = 50, 32, 2, 8, 5

    key = jax.random.PRNGKey(0)
    pkey, k_in, k_tgt, k_neg = jax.random.split(key, 4)
    params = init_params(pkey, VOCAB, E)

    input_lengths = jnp.array([8, 5], dtype=jnp.int32)
    valid = jnp.arange(T)[None, :] < input_lengths[:, None]              # (B, T)

    input_encoded = jnp.where(
        valid, jax.random.randint(k_in, (B, T), 1, VOCAB), PAD_IDX
    ).astype(jnp.int32)
    target_encoded = jnp.where(
        valid, jax.random.randint(k_tgt, (B, T), 1, VOCAB), PAD_IDX
    ).astype(jnp.int32)
    neg_samples = jax.random.randint(k_neg, (B, T, K), 1, VOCAB).astype(jnp.int32)

    loss, preds, gt_flat, mask = forward(
        params, input_encoded, target_encoded, input_lengths, neg_samples
    )
    jax.block_until_ready((loss, preds))

    # masked_select equivalent (variable-length output -> host-side boolean indexing).
    mask_np = np.asarray(mask)
    predictions = np.asarray(preds)[mask_np]
    ground_truth = np.asarray(gt_flat)[mask_np]

    assert np.isfinite(float(loss))
    assert predictions.shape == ground_truth.shape

    print("KERNEL_OK")
</pallas_src>

<mosaic_0001>
module attributes {stable_mosaic.version = 11 : i64} {
  func.func @_lstm_kernel(%arg0: i32, %arg1: memref<4x8x128xf32, #tpu.memory_space<vmem>>, %arg2: memref<32x128xbf16, #tpu.memory_space<vmem>>, %arg3: memref<4x8x32xf32, #tpu.memory_space<vmem>>, %arg4: memref<8x32xf32, #tpu.memory_space<vmem>>, %arg5: memref<8x32xf32, #tpu.memory_space<vmem>>) attributes {dimension_semantics = [#tpu.dimension_semantics<arbitrary>], iteration_bounds = array<i64: 2>, scalar_prefetch = 0 : i64, scratch_operands = 2 : i64, tpu.core_type = #tpu.core_type<tc>, window_params = [{transform_indices = @transform_0, window_bounds = array<i64: 4, 8, 128>}, {pipeline_mode = #tpu.pipeline_mode<synchronous>, transform_indices = @transform_1, window_bounds = array<i64: 32, 128>}, {transform_indices = @transform_2, window_bounds = array<i64: 4, 8, 32>}]} {
    %c0_i32 = arith.constant 0 : i32
    %0 = arith.cmpi eq, %arg0, %c0_i32 : i32
    %1 = arith.extui %0 : i1 to i32
    %c0_i32_0 = arith.constant 0 : i32
    %2 = arith.cmpi ne, %1, %c0_i32_0 : i32
    scf.if %2 {
      %cst_42 = arith.constant 0.000000e+00 : f32
      %148 = vector.broadcast %cst_42 : f32 to vector<8x32xf32>
      %c0_43 = arith.constant 0 : index
      %c0_44 = arith.constant 0 : index
      %149 = vector.load %arg4[%c0_43, %c0_44] : memref<8x32xf32, #tpu.memory_space<vmem>>, vector<8x32xf32>
      tpu.vector_store %arg4[%c0_43, %c0_44], %148 {strides = array<i32>} : memref<8x32xf32, #tpu.memory_space<vmem>>, vector<8x32xf32>,
      %cst_45 = arith.constant 0.000000e+00 : f32
      %150 = vector.broadcast %cst_45 : f32 to vector<8x32xf32>
      %c0_46 = arith.constant 0 : index
      %c0_47 = arith.constant 0 : index
      %151 = vector.load %arg5[%c0_46, %c0_47] : memref<8x32xf32, #tpu.memory_space<vmem>>, vector<8x32xf32>
      tpu.vector_store %arg5[%c0_46, %c0_47], %150 {strides = array<i32>} : memref<8x32xf32, #tpu.memory_space<vmem>>, vector<8x32xf32>,
    } else {
    }
    %c0 = arith.constant 0 : index
    %c0_1 = arith.constant 0 : index
    %3 = vector.load %arg2[%c0, %c0_1] : memref<32x128xbf16, #tpu.memory_space<vmem>>, vector<32x128xbf16>
    %c0_2 = arith.constant 0 : index
    %c0_3 = arith.constant 0 : index
    %4 = vector.load %arg4[%c0_2, %c0_3] : memref<8x32xf32, #tpu.memory_space<vmem>>, vector<8x32xf32>
    %c0_4 = arith.constant 0 : index
    %c0_5 = arith.constant 0 : index
    %5 = vector.load %arg5[%c0_4, %c0_5] : memref<8x32xf32, #tpu.memory_space<vmem>>, vector<8x32xf32>
    %c0_i32_6 = arith.constant 0 : i32
    %6 = arith.index_cast %c0_i32_6 : i32 to index
    %c0_7 = arith.constant 0 : index
    %c0_8 = arith.constant 0 : index
    %7 = vector.load %arg1[%6, %c0_7, %c0_8] : memref<4x8x128xf32, #tpu.memory_space<vmem>>, vector<1x8x128xf32>
    %8 = vector.shape_cast %7 : vector<1x8x128xf32> to vector<8x128xf32>
    %9 = arith.truncf %4 : vector<8x32xf32> to vector<8x32xbf16>
    %cst = arith.constant dense<0.000000e+00> : vector<8x128xf32>
    %10 = tpu.matmul %9, %3, %cst {dimension_numbers = #tpu.dot_dimension_numbers<[1], [0], [0], [1], [0, 0, 1, 1], [], []>} : vector<8x32xbf16>, vector<32x128xbf16>, vector<8x128xf32> -> vector<8x128xf32>
    %11 = arith.addf %8, %10 : vector<8x128xf32>
    %12 = vector.extract_strided_slice %11 {offsets = [0, 0], sizes = [8, 32], strides = [1, 1]} : vector<8x128xf32> to vector<8x32xf32>
    %13 = arith.negf %12 : vector<8x32xf32>
    %14 = math.exp %13 : vector<8x32xf32>
    %cst_9 = arith.constant 1.000000e+00 : f32
    %15 = vector.broadcast %cst_9 : f32 to vector<8x32xf32>
    %16 = arith.addf %15, %14 : vector<8x32xf32>
    %17 = arith.divf %15, %16 : vector<8x32xf32>
    %18 = vector.extract_strided_slice %11 {offsets = [0, 32], sizes = [8, 32], strides = [1, 1]} : vector<8x128xf32> to vector<8x32xf32>
    %19 = arith.negf %18 : vector<8x32xf32>
    %20 = math.exp %19 : vector<8x32xf32>
    %cst_10 = arith.constant 1.000000e+00 : f32
    %21 = vector.broadcast %cst_10 : f32 to vector<8x32xf32>
    %22 = arith.addf %21, %20 : vector<8x32xf32>
    %23 = arith.divf %21, %22 : vector<8x32xf32>
    %24 = vector.extract_strided_slice %11 {offsets = [0, 64], sizes = [8, 32], strides = [1, 1]} : vector<8x128xf32> to vector<8x32xf32>
    %25 = math.tanh %24 : vector<8x32xf32>
    %26 = vector.extract_strided_slice %11 {offsets = [0, 96], sizes = [8, 32], strides = [1, 1]} : vector<8x128xf32> to vector<8x32xf32>
    %27 = arith.negf %26 : vector<8x32xf32>
    %28 = math.exp %27 : vector<8x32xf32>
    %cst_11 = arith.constant 1.000000e+00 : f32
    %29 = vector.broadcast %cst_11 : f32 to vector<8x32xf32>
    %30 = arith.addf %29, %28 : vector<8x32xf32>
    %31 = arith.divf %29, %30 : vector<8x32xf32>
    %32 = arith.mulf %23, %5 : vector<8x32xf32>
    %33 = arith.mulf %17, %25 : vector<8x32xf32>
    %34 = arith.addf %32, %33 : vector<8x32xf32>
    %35 = math.tanh %34 : vector<8x32xf32>
    %36 = arith.mulf %31, %35 : vector<8x32xf32>
    %37 = arith.index_cast %c0_i32_6 : i32 to index
    %c0_12 = arith.constant 0 : index
    %c0_13 = arith.constant 0 : index
    %38 = vector.load %arg3[%37, %c0_12, %c0_13] : memref<4x8x32xf32, #tpu.memory_space<vmem>>, vector<1x8x32xf32>
    %39 = vector.shape_cast %38 : vector<1x8x32xf32> to vector<8x32xf32>
    %40 = vector.shape_cast %36 : vector<8x32xf32> to vector<1x8x32xf32>
    tpu.vector_store %arg3[%37, %c0_12, %c0_13], %40 {strides = array<i32>} : memref<4x8x32xf32, #tpu.memory_space<vmem>>, vector<1x8x32xf32>,
    %c1_i32 = arith.constant 1 : i32
    %41 = arith.index_cast %c1_i32 : i32 to index
    %c0_14 = arith.constant 0 : index
    %c0_15 = arith.constant 0 : index
    %42 = vector.load %arg1[%41, %c0_14, %c0_15] : memref<4x8x128xf32, #tpu.memory_space<vmem>>, vector<1x8x128xf32>
    %43 = vector.shape_cast %42 : vector<1x8x128xf32> to vector<8x128xf32>
    %44 = arith.truncf %36 : vector<8x32xf32> to vector<8x32xbf16>
    %cst_16 = arith.constant dense<0.000000e+00> : vector<8x128xf32>
    %45 = tpu.matmul %44, %3, %cst_16 {dimension_numbers = #tpu.dot_dimension_numbers<[1], [0], [0], [1], [0, 0, 1, 1], [], []>} : vector<8x32xbf16>, vector<32x128xbf16>, vector<8x128xf32> -> vector<8x128xf32>
    %46 = arith.addf %43, %45 : vector<8x128xf32>
    %47 = vector.extract_strided_slice %46 {offsets = [0, 0], sizes = [8, 32], strides = [1, 1]} : vector<8x128xf32> to vector<8x32xf32>
    %48 = arith.negf %47 : vector<8x32xf32>
    %49 = math.exp %48 : vector<8x32xf32>
    %cst_17 = arith.constant 1.000000e+00 : f32
    %50 = vector.broadcast %cst_17 : f32 to vector<8x32xf32>
    %51 = arith.addf %50, %49 : vector<8x32xf32>
    %52 = arith.divf %50, %51 : vector<8x32xf32>
    %53 = vector.extract_strided_slice %46 {offsets = [0, 32], sizes = [8, 32], strides = [1, 1]} : vector<8x128xf32> to vector<8x32xf32>
    %54 = arith.negf %53 : vector<8x32xf32>
    %55 = math.exp %54 : vector<8x32xf32>
    %cst_18 = arith.constant 1.000000e+00 : f32
    %56 = vector.broadcast %cst_18 : f32 to vector<8x32xf32>
    %57 = arith.addf %56, %55 : vector<8x32xf32>
    %58 = arith.divf %56, %57 : vector<8x32xf32>
    %59 = vector.extract_strided_slice %46 {offsets = [0, 64], sizes = [8, 32], strides = [1, 1]} : vector<8x128xf32> to vector<8x32xf32>
    %60 = math.tanh %59 : vector<8x32xf32>
    %61 = vector.extract_strided_slice %46 {offsets = [0, 96], sizes = [8, 32], strides = [1, 1]} : vector<8x128xf32> to vector<8x32xf32>
    %62 = arith.negf %61 : vector<8x32xf32>
    %63 = math.exp %62 : vector<8x32xf32>
    %cst_19 = arith.constant 1.000000e+00 : f32
    %64 = vector.broadcast %cst_19 : f32 to vector<8x32xf32>
    %65 = arith.addf %64, %63 : vector<8x32xf32>
    %66 = arith.divf %64, %65 : vector<8x32xf32>
    %67 = arith.mulf %58, %34 : vector<8x32xf32>
    %68 = arith.mulf %52, %60 : vector<8x32xf32>
    %69 = arith.addf %67, %68 : vector<8x32xf32>
    %70 = math.tanh %69 : vector<8x32xf32>
    %71 = arith.mulf %66, %70 : vector<8x32xf32>
    %72 = arith.index_cast %c1_i32 : i32 to index
    %c0_20 = arith.constant 0 : index
    %c0_21 = arith.constant 0 : index
    %73 = vector.load %arg3[%72, %c0_20, %c0_21] : memref<4x8x32xf32, #tpu.memory_space<vmem>>, vector<1x8x32xf32>
    %74 = vector.shape_cast %73 : vector<1x8x32xf32> to vector<8x32xf32>
    %75 = vector.shape_cast %71 : vector<8x32xf32> to vector<1x8x32xf32>
    tpu.vector_store %arg3[%72, %c0_20, %c0_21], %75 {strides = array<i32>} : memref<4x8x32xf32, #tpu.memory_space<vmem>>, vector<1x8x32xf32>,
    %c2_i32 = arith.constant 2 : i32
    %76 = arith.index_cast %c2_i32 : i32 to index
    %c0_22 = arith.constant 0 : index
    %c0_23 = arith.constant 0 : index
    %77 = vector.load %arg1[%76, %c0_22, %c0_23] : memref<4x8x128xf32, #tpu.memory_space<vmem>>, vector<1x8x128xf32>
    %78 = vector.shape_cast %77 : vector<1x8x128xf32> to vector<8x128xf32>
    %79 = arith.truncf %71 : vector<8x32xf32> to vector<8x32xbf16>
    %cst_24 = arith.constant dense<0.000000e+00> : vector<8x128xf32>
    %80 = tpu.matmul %79, %3, %cst_24 {dimension_numbers = #tpu.dot_dimension_numbers<[1], [0], [0], [1], [0, 0, 1, 1], [], []>} : vector<8x32xbf16>, vector<32x128xbf16>, vector<8x128xf32> -> vector<8x128xf32>
    %81 = arith.addf %78, %80 : vector<8x128xf32>
    %82 = vector.extract_strided_slice %81 {offsets = [0, 0], sizes = [8, 32], strides = [1, 1]} : vector<8x128xf32> to vector<8x32xf32>
    %83 = arith.negf %82 : vector<8x32xf32>
    %84 = math.exp %83 : vector<8x32xf32>
    %cst_25 = arith.constant 1.000000e+00 : f32
    %85 = vector.broadcast %cst_25 : f32 to vector<8x32xf32>
    %86 = arith.addf %85, %84 : vector<8x32xf32>
    %87 = arith.divf %85, %86 : vector<8x32xf32>
    %88 = vector.extract_strided_slice %81 {offsets = [0, 32], sizes = [8, 32], strides = [1, 1]} : vector<8x128xf32> to vector<8x32xf32>
    %89 = arith.negf %88 : vector<8x32xf32>
    %90 = math.exp %89 : vector<8x32xf32>
    %cst_26 = arith.constant 1.000000e+00 : f32
    %91 = vector.broadcast %cst_26 : f32 to vector<8x32xf32>
    %92 = arith.addf %91, %90 : vector<8x32xf32>
    %93 = arith.divf %91, %92 : vector<8x32xf32>
    %94 = vector.extract_strided_slice %81 {offsets = [0, 64], sizes = [8, 32], strides = [1, 1]} : vector<8x128xf32> to vector<8x32xf32>
    %95 = math.tanh %94 : vector<8x32xf32>
    %96 = vector.extract_strided_slice %81 {offsets = [0, 96], sizes = [8, 32], strides = [1, 1]} : vector<8x128xf32> to vector<8x32xf32>
    %97 = arith.negf %96 : vector<8x32xf32>
    %98 = math.exp %97 : vector<8x32xf32>
    %cst_27 = arith.constant 1.000000e+00 : f32
    %99 = vector.broadcast %cst_27 : f32 to vector<8x32xf32>
    %100 = arith.addf %99, %98 : vector<8x32xf32>
    %101 = arith.divf %99, %100 : vector<8x32xf32>
    %102 = arith.mulf %93, %69 : vector<8x32xf32>
    %103 = arith.mulf %87, %95 : vector<8x32xf32>
    %104 = arith.addf %102, %103 : vector<8x32xf32>
    %105 = math.tanh %104 : vector<8x32xf32>
    %106 = arith.mulf %101, %105 : vector<8x32xf32>
    %107 = arith.index_cast %c2_i32 : i32 to index
    %c0_28 = arith.constant 0 : index
    %c0_29 = arith.constant 0 : index
    %108 = vector.load %arg3[%107, %c0_28, %c0_29] : memref<4x8x32xf32, #tpu.memory_space<vmem>>, vector<1x8x32xf32>
    %109 = vector.shape_cast %108 : vector<1x8x32xf32> to vector<8x32xf32>
    %110 = vector.shape_cast %106 : vector<8x32xf32> to vector<1x8x32xf32>
    tpu.vector_store %arg3[%107, %c0_28, %c0_29], %110 {strides = array<i32>} : memref<4x8x32xf32, #tpu.memory_space<vmem>>, vector<1x8x32xf32>,
    %c3_i32 = arith.constant 3 : i32
    %111 = arith.index_cast %c3_i32 : i32 to index
    %c0_30 = arith.constant 0 : index
    %c0_31 = arith.constant 0 : index
    %112 = vector.load %arg1[%111, %c0_30, %c0_31] : memref<4x8x128xf32, #tpu.memory_space<vmem>>, vector<1x8x128xf32>
    %113 = vector.shape_cast %112 : vector<1x8x128xf32> to vector<8x128xf32>
    %114 = arith.truncf %106 : vector<8x32xf32> to vector<8x32xbf16>
    %cst_32 = arith.constant dense<0.000000e+00> : vector<8x128xf32>
    %115 = tpu.matmul %114, %3, %cst_32 {dimension_numbers = #tpu.dot_dimension_numbers<[1], [0], [0], [1], [0, 0, 1, 1], [], []>} : vector<8x32xbf16>, vector<32x128xbf16>, vector<8x128xf32> -> vector<8x128xf32>
    %116 = arith.addf %113, %115 : vector<8x128xf32>
    %117 = vector.extract_strided_slice %116 {offsets = [0, 0], sizes = [8, 32], strides = [1, 1]} : vector<8x128xf32> to vector<8x32xf32>
    %118 = arith.negf %117 : vector<8x32xf32>
    %119 = math.exp %118 : vector<8x32xf32>
    %cst_33 = arith.constant 1.000000e+00 : f32
    %120 = vector.broadcast %cst_33 : f32 to vector<8x32xf32>
    %121 = arith.addf %120, %119 : vector<8x32xf32>
    %122 = arith.divf %120, %121 : vector<8x32xf32>
    %123 = vector.extract_strided_slice %116 {offsets = [0, 32], sizes = [8, 32], strides = [1, 1]} : vector<8x128xf32> to vector<8x32xf32>
    %124 = arith.negf %123 : vector<8x32xf32>
    %125 = math.exp %124 : vector<8x32xf32>
    %cst_34 = arith.constant 1.000000e+00 : f32
    %126 = vector.broadcast %cst_34 : f32 to vector<8x32xf32>
    %127 = arith.addf %126, %125 : vector<8x32xf32>
    %128 = arith.divf %126, %127 : vector<8x32xf32>
    %129 = vector.extract_strided_slice %116 {offsets = [0, 64], sizes = [8, 32], strides = [1, 1]} : vector<8x128xf32> to vector<8x32xf32>
    %130 = math.tanh %129 : vector<8x32xf32>
    %131 = vector.extract_strided_slice %116 {offsets = [0, 96], sizes = [8, 32], strides = [1, 1]} : vector<8x128xf32> to vector<8x32xf32>
    %132 = arith.negf %131 : vector<8x32xf32>
    %133 = math.exp %132 : vector<8x32xf32>
    %cst_35 = arith.constant 1.000000e+00 : f32
    %134 = vector.broadcast %cst_35 : f32 to vector<8x32xf32>
    %135 = arith.addf %134, %133 : vector<8x32xf32>
    %136 = arith.divf %134, %135 : vector<8x32xf32>
    %137 = arith.mulf %128, %104 : vector<8x32xf32>
    %138 = arith.mulf %122, %130 : vector<8x32xf32>
    %139 = arith.addf %137, %138 : vector<8x32xf32>
    %140 = math.tanh %139 : vector<8x32xf32>
    %141 = arith.mulf %136, %140 : vector<8x32xf32>
    %142 = arith.index_cast %c3_i32 : i32 to index
    %c0_36 = arith.constant 0 : index
    %c0_37 = arith.constant 0 : index
    %143 = vector.load %arg3[%142, %c0_36, %c0_37] : memref<4x8x32xf32, #tpu.memory_space<vmem>>, vector<1x8x32xf32>
    %144 = vector.shape_cast %143 : vector<1x8x32xf32> to vector<8x32xf32>
    %145 = vector.shape_cast %141 : vector<8x32xf32> to vector<1x8x32xf32>
    tpu.vector_store %arg3[%142, %c0_36, %c0_37], %145 {strides = array<i32>} : memref<4x8x32xf32, #tpu.memory_space<vmem>>, vector<1x8x32xf32>,
    %c4_i32 = arith.constant 4 : i32
    %c0_38 = arith.constant 0 : index
    %c0_39 = arith.constant 0 : index
    %146 = vector.load %arg4[%c0_38, %c0_39] : memref<8x32xf32, #tpu.memory_space<vmem>>, vector<8x32xf32>
    tpu.vector_store %arg4[%c0_38, %c0_39], %141 {strides = array<i32>} : memref<8x32xf32, #tpu.memory_space<vmem>>, vector<8x32xf32>,
    %c0_40 = arith.constant 0 : index
    %c0_41 = arith.constant 0 : index
    %147 = vector.load %arg5[%c0_40, %c0_41] : memref<8x32xf32, #tpu.memory_space<vmem>>, vector<8x32xf32>
    tpu.vector_store %arg5[%c0_40, %c0_41], %139 {strides = array<i32>} : memref<8x32xf32, #tpu.memory_space<vmem>>, vector<8x32xf32>,
    return
  }
  func.func @transform_0(%arg0: i32) -> (i32, i32, i32) {
    %c0_i32 = arith.constant 0 : i32
    %c0_i32_0 = arith.constant 0 : i32
    %c0_i32_1 = arith.constant 0 : i32
    return %arg0, %c0_i32, %c0_i32_0 : i32, i32, i32
  }
  func.func @transform_1(%arg0: i32) -> (i32, i32) {
    %c0_i32 = arith.constant 0 : i32
    %c0_i32_0 = arith.constant 0 : i32
    %c0_i32_1 = arith.constant 0 : i32
    return %c0_i32, %c0_i32_0 : i32, i32
  }
  func.func @transform_2(%arg0: i32) -> (i32, i32, i32) {
    %c0_i32 = arith.constant 0 : i32
    %c0_i32_0 = arith.constant 0 : i32
    %c0_i32_1 = arith.constant 0 : i32
    return %arg0, %c0_i32, %c0_i32_0 : i32, i32, i32
  }
}

</mosaic_0001>

<llo_original>
// kernel: tpu_custom_call.1
$region0: #{tpu_custom_call.1}
  #allocation0 [shape = 'u32[]', space=smem, size = 0x4, offset = 0x4, fixed_abs, tag = 'smem constant byte address 0x4 - core index']
  #allocation1 [shape = 'u32[144,128]{1,0:T(1,128)}', space=vmem, size = 0x12000, scoped, tag = 'internal scratch']
  #allocation2 [shape = 'f32[8,32]{1,0:T(8,128)}', space=vmem, size = 0x1000, scoped, tag = 'scratch operand']
  #allocation3 [shape = 'f32[8,32]{1,0:T(8,128)}', space=vmem, size = 0x1000, scoped, tag = 'scratch operand']
  %s0 = inlined_call_operand.hbm [shape: f32[8,8,128], index: 0, kind: input, shape index: {}]
  %s1 = inlined_call_operand.hbm [shape: bf16[32,128], index: 1, kind: input, shape index: {}]
  %s2 = inlined_call_operand.hbm [shape: f32[8,8,32], index: 2, kind: output, shape index: {}]
  %s3 = sld [smem:[#allocation0]]
  $region53: #{tpu_custom_call.1} parent=0
    _
  %s5 = ssub.s32 1, %s3
  %s6 = scalar_select 0, %s5, %s3
  $region1: #{tpu_custom_call.1} parent=0
    #allocation4 [shape = 'u8[32768]{0}', space=vmem, size = 0x8000, scoped, tag = 'input window, operand 0']
    #allocation5 [shape = 's32[2]{0}', space=sflag, size = 0x8, scoped, tag = 'scoped memory for tpu_custom_call.1']
    #allocation6 [shape = 's32[2]{0}', space=sflag, size = 0x8, scoped, tag = 'scoped memory for tpu_custom_call.1']
    #allocation7 [shape = 'u8[8192]{0}', space=vmem, size = 0x2000, scoped, tag = 'input window, operand 1, single buffered']
    #allocation8 [shape = 's32[1]{0}', space=sflag, size = 0x4, scoped, tag = 'scoped memory for tpu_custom_call.1']
    #allocation9 [shape = 'u8[32768]{0}', space=vmem, size = 0x8000, scoped, tag = 'output window, operand 0']
    %7 = vsyncpa [#allocation5], 0
    %s8 = scalar_lea.sflag [#allocation5], 1
    %9 = vsyncpa %s8, 0
    %10 = vsyncpa [#allocation8], 0
    %11 = vsyncpa [#allocation6], 0
    %s12 = scalar_lea.sflag [#allocation6], 1
    %13 = vsyncpa %s12, 0
    loop: start=0, step=1, limit=4
    $region2: #{tpu_custom_call.1} parent=1 // loop_pre_header
      _
    $region3: #{tpu_custom_call.1} parent=1 // loop_header
      %s15 = sphi 0, %s19
      %p16 = scmp.ge.s32.totalorder %s15, 4
      %s25 = sphi 0, %s27
      %s28 = sphi 0, %s25
      %s29 = sphi 0, %s28
      %s45 = sphi 0, %s29
      %s49 = sphi 0, %s49
      %s51 = sphi 0, %s49
      %s52 = sphi 0, %s51
      %s66 = sphi 0, %s52
      %s72 = sphi 0, %s74
      %s75 = sphi 0, %s72
      %s76 = sphi 0, %s75
      %s92 = sphi 0, %s76
    $region4: #{tpu_custom_call.1} parent=1 // loop_header_branch
      %18 = sbr.rel (%p16) target = $region8
    $region5: #{tpu_custom_call.1} parent=1 // loop_body
      %s20 = ssub.s32 %s15, 1
      %s21 = ssub.s32 %s15, 2
      %s22 = sadd.s32 %s15, 1
      %s23 = ssub.s32 %s15, %s22
      %p24 = scmp.eq.s32.totalorder %s23, 0
      %s26 = sadd.s32 %s25, 1
      %s27 = scalar_select %p24, %s25, %s26
      %p30 = pneg %p24
      %p31 = scmp.eq.s32.totalorder %s15, 1
      %p32 = por %p30, %p31
      %p33 = scmp.ne.s32.totalorder %s25, %s28
      %p34 = scmp.eq.s32.totalorder %s15, 0
      %p35 = por %p33, %p34
      %p36 = scmp.ne.s32.totalorder %s25, %s28
      %p37 = scmp.eq.s32.totalorder %s20, 1
      %p38 = por %p36, %p37
      %p39 = scmp.ne.s32.totalorder %s28, %s29
      %p40 = scmp.eq.s32.totalorder %s20, 0
      %p41 = por %p39, %p40
      %p42 = scmp.ne.s32.totalorder %s28, %s29
      %p43 = scmp.eq.s32.totalorder %s21, 1
      %p44 = por %p42, %p43
      %p46 = scmp.ne.s32.totalorder %s29, %s45
      %p47 = scmp.eq.s32.totalorder %s21, 0
      %p48 = por %p46, %p47
      %s50 = sadd.s32 %s49, 1
      %p53 = scmp.eq.s32.totalorder %s15, 1
      %p54 = scmp.ne.s32.totalorder %s49, %s51
      %p55 = scmp.eq.s32.totalorder %s15, 0
      %p56 = por %p54, %p55
      %p57 = scmp.ne.s32.totalorder %s49, %s51
      %p58 = scmp.eq.s32.totalorder %s20, 1
      %p59 = por %p57, %p58
      %p60 = scmp.ne.s32.totalorder %s51, %s52
      %p61 = scmp.eq.s32.totalorder %s20, 0
      %p62 = por %p60, %p61
      %p63 = scmp.ne.s32.totalorder %s51, %s52
      %p64 = scmp.eq.s32.totalorder %s21, 1
      %p65 = por %p63, %p64
      %p67 = scmp.ne.s32.totalorder %s52, %s66
      %p68 = scmp.eq.s32.totalorder %s21, 0
      %p69 = por %p67, %p68
      %s70 = ssub.s32 %s15, %s22
      %p71 = scmp.eq.s32.totalorder %s70, 0
      %s73 = sadd.s32 %s72, 1
      %s74 = scalar_select %p71, %s72, %s73
      %p77 = pneg %p71
      %p78 = scmp.eq.s32.totalorder %s15, 1
      %p79 = por %p77, %p78
      %p80 = scmp.ne.s32.totalorder %s72, %s75
      %p81 = scmp.eq.s32.totalorder %s15, 0
      %p82 = por %p80, %p81
      %p83 = scmp.ne.s32.totalorder %s72, %s75
      %p84 = scmp.eq.s32.totalorder %s20, 1
      %p85 = por %p83, %p84
      %p86 = scmp.ne.s32.totalorder %s75, %s76
      %p87 = scmp.eq.s32.totalorder %s20, 0
      %p88 = por %p86, %p87
      %p89 = scmp.ne.s32.totalorder %s75, %s76
      %p90 = scmp.eq.s32.totalorder %s21, 1
      %p91 = por %p89, %p90
      %p93 = scmp.ne.s32.totalorder %s76, %s92
      %p94 = scmp.eq.s32.totalorder %s21, 0
      %p95 = por %p93, %p94
      %p96 = scmp.le.s32.totalorder 1, %s15
      %p97 = scmp.lt.s32.totalorder %s15, 3
      %p98 = pnand %p96, %p97
      %p99 = pneg %p98
      // Predicated region
      $region9: #{tpu_custom_call.1} parent=5 // pred_check
        _
      $region10: #{tpu_custom_call.1} parent=5 // pred_check_branch
        %101 = sbr.rel (%p98) target = $region12
      $region11: #{tpu_custom_call.1} parent=5 // pred_region
        %s102 = ssub.s32 %s15, 1
        // Predicated region
        $region13: #{tpu_custom_call.1} parent=11 // pred_check
          %p103 = pneg %p62
        $region14: #{tpu_custom_call.1} parent=11 // pred_check_branch
          %105 = sbr.rel (%p103) target = $region16
        $region15: #{tpu_custom_call.1} parent=11 // pred_region
          %s107 = ssub.s32 256, 256
          %108 = vsyncadd [#allocation8], %s107
          %s109 = sshll.u32 [#allocation7], 4
          %s110 = int_to_ptr.vmem [resolvable:$true] %s109
          %115 = dma.hbm_to_vmem [thread:$0]  %s1, 256, %s110, [#allocation8], 64, 64, 4
        $region16: #{tpu_custom_call.1} parent=11 // pred_fallthru
          _
      $region12: #{tpu_custom_call.1} parent=5 // pred_fallthru
        _
      %p116 = scmp.lt.s32.totalorder %s15, 2
      // Predicated region
      $region17: #{tpu_custom_call.1} parent=5 // pred_check
        %p117 = pneg %p116
      $region18: #{tpu_custom_call.1} parent=5 // pred_check_branch
        %119 = sbr.rel (%p117) target = $region20
      $region19: #{tpu_custom_call.1} parent=5 // pred_region
        // Predicated region
        $region21: #{tpu_custom_call.1} parent=19 // pred_check
          %p120 = pneg %p35
        $region22: #{tpu_custom_call.1} parent=19 // pred_check_branch
          %122 = sbr.rel (%p120) target = $region24
        $region23: #{tpu_custom_call.1} parent=19 // pred_region
          %s123 = sand.u32 %s25, 1
          %s124 = scalar_lea.sflag [#allocation5], %s123
          %s125 = sand.u32 %s25, 1
          %s126 = smul.addr %s125, 32
          %s127 = scalar_lea.vmem [#allocation4], %s126
          %s128 = smul.u32 4, %s15
          %s130 = ssub.s32 512, 512
          %131 = vsyncadd %s124, %s130
          %s132 = smul.addr %s128, 128
          %s133 = scalar_lea.hbm %s0, %s132
          %s134 = sshll.u32 %s127, 4
          %s135 = int_to_ptr.vmem [resolvable:$true] %s134
          %140 = dma.hbm_to_vmem [thread:$0]  %s133, 512, %s135, %s124, 128, 128, 8
        $region24: #{tpu_custom_call.1} parent=19 // pred_fallthru
          _
      $region20: #{tpu_custom_call.1} parent=5 // pred_fallthru
        _
      %p141 = scmp.le.s32.totalorder 1, %s15
      %p142 = scmp.lt.s32.totalorder %s15, 3
      %p143 = pnand %p141, %p142
      %p144 = pneg %p143
      // Predicated region
      $region25: #{tpu_custom_call.1} parent=5 // pred_check
        _
      $region26: #{tpu_custom_call.1} parent=5 // pred_check_branch
        %146 = sbr.rel (%p143) target = $region28
      $region27: #{tpu_custom_call.1} parent=5 // pred_region
        %s147 = ssub.s32 %s15, 1
        %s148 = sand.u32 %s28, 1
        %s149 = scalar_lea.sflag [#allocation5], %s148
        %s150 = sand.u32 %s28, 1
        %s151 = smul.addr %s150, 32
        %s152 = scalar_lea.vmem [#allocation4], %s151
        // Predicated region
        $region29: #{tpu_custom_call.1} parent=27 // pred_check
          %p153 = pneg %p41
        $region30: #{tpu_custom_call.1} parent=27 // pred_check_branch
          %155 = sbr.rel (%p153) target = $region32
        $region31: #{tpu_custom_call.1} parent=27 // pred_region
          %156 = dma.done %s149, 512
        $region32: #{tpu_custom_call.1} parent=27 // pred_fallthru
          _
        // Predicated region
        $region33: #{tpu_custom_call.1} parent=27 // pred_check
          %p157 = pneg %p62
        $region34: #{tpu_custom_call.1} parent=27 // pred_check_branch
          %159 = sbr.rel (%p157) target = $region36
        $region35: #{tpu_custom_call.1} parent=27 // pred_region
          %160 = dma.done [#allocation8], 256
        $region36: #{tpu_custom_call.1} parent=27 // pred_fallthru
          _
        %s161 = sand.u32 %s28, 1
        %s162 = scalar_lea.sflag [#allocation5], %s161
        %s163 = sand.u32 %s28, 1
        %s164 = smul.addr %s163, 32
        %s165 = scalar_lea.vmem [#allocation4], %s164
        %p166 = pneg %p41
        %p167 = pneg %p38
        %p168 = pneg %p62
        %p169 = pneg %p59
        %p170 = pneg %p88
        %p171 = pneg %p85
        %s172 = sand.u32 %s75, 1
        %s173 = scalar_lea.sflag [#allocation6], %s172
        %s174 = sand.u32 %s75, 1
        %s175 = smul.addr %s174, 32
        %s176 = scalar_lea.vmem [#allocation9], %s175
        %s177 = smul.u32 4, %s20
        %s178 = smul.u32 4, %s20
        %p180 = scmp.eq.s32.totalorder %s20, 0
        // Predicated region
        $region37: #{tpu_custom_call.1} parent=27 // pred_check
          %p181 = pneg %p180
        $region38: #{tpu_custom_call.1} parent=27 // pred_check_branch
          %183 = sbr.rel (%p181) target = $region40
        $region39: #{tpu_custom_call.1} parent=27 // pred_region
          %vm184 = vcmask 261120
          %185 = vst.msk [vmem:[#allocation2] sm:$0xff] %vm184, 0.0
          %186 = vst.msk [vmem:[#allocation3] sm:$0xff] %vm184, 0.0
        $region40: #{tpu_custom_call.1} parent=27 // pred_fallthru
          _
        %v187 = vld [vmem:[#allocation7] sm:$0xf]
        %v188 = vld [vmem:[#allocation7 + $0x4] sm:$0xf]
        %v189 = vld [vmem:[#allocation7 + $0x8] sm:$0xf]
        %v190 = vld [vmem:[#allocation7 + $0xc] sm:$0xf]
        %v191 = vld [vmem:[#allocation2] sm:$0xff]
        %v192 = vld [vmem:[#allocation3] sm:$0xff]
        %v193 = vld [vmem:[%s152] sm:$0xff]
        %v194 = vpack.c.bf16 %v191, %v191
        %v199 = vunpack.c.l.b16 %v187
        %v200 = vunpack.c.l.b16 %v188
        %v201 = vunpack.c.l.b16 %v189
        %v202 = vunpack.c.l.b16 %v190
        %v203 = vpack.c.b16 %v200, %v199
        %v204 = vpack.c.b16 %v202, %v201
        %vm207 = vcmask 261120
        %v209 = vsel %vm207, %v194, 0
        %211 = vmatprep.subr.bf16.mxu0 0
        %212 = vmatpush1.bf16.msra.mxu0 %v203
        %213 = vmatprep.subr.bf16.mxu0 0
        %214 = vmatpush1.bf16.msra.mxu0 %v204
        %215 = vmatprep.subr.bf16.mxu0 0
        %216 = vmatpush1.bf16.msra.mxu0 0
        %217 = vmatprep.subr.bf16.mxu0 0
        %218 = vmatpush1.bf16.msra.mxu0 0
        %219 = vmatprep.subr.bf16.mxu0 0
        %220 = vmatpush1.bf16.msra.mxu0 0
        %221 = vmatprep.subr.bf16.mxu0 0
        %222 = vmatpush1.bf16.msra.mxu0 0
        %223 = vmatprep.subr.bf16.mxu0 0
        %224 = vmatpush1.bf16.msra.mxu0 0
        %225 = vmatprep.subr.bf16.mxu0 0
        %226 = vmatpush1.bf16.msra.mxu0 0
        %227 = vmatprep.subr.bf16.mxu0 0
        %228 = vmatpush1.bf16.msra.mxu0 0
        %229 = vmatprep.subr.bf16.mxu0 0
        %230 = vmatpush1.bf16.msra.mxu0 0
        %231 = vmatprep.subr.bf16.mxu0 0
        %232 = vmatpush1.bf16.msra.mxu0 0
        %233 = vmatprep.subr.bf16.mxu0 0
        %234 = vmatpush1.bf16.msra.mxu0 0
        %235 = vmatprep.subr.bf16.mxu0 0
        %236 = vmatpush1.bf16.msra.mxu0 0
        %237 = vmatprep.subr.bf16.mxu0 0
        %238 = vmatpush1.bf16.msra.mxu0 0
        %239 = vmatprep.subr.bf16.mxu0 0
        %240 = vmatpush1.bf16.msra.mxu0 0
        %241 = vmatprep.subr.bf16.mxu0 0
        %242 = vmatpush1.bf16.msra.mxu0 0
        %243 = vmatprep.mubr.bf16.mxu0 0
        %244 = vmatmul.mubr.bf16.gmra.mrb[0].mxu0 %v209
        %v245 = vpop.f32.mrb[0].mxu0
        %v246 = vadd.f32 0.0, %v245
        %v247 = vpop.f32.mrb[0].mxu0
        %v248 = vpop.f32.mrb[0].mxu0
        %v249 = vpop.f32.mrb[0].mxu0
        %250 = vdwg.mxu0
        %v251 = vadd.f32 %v193, %v246
        %v252 = vxor.u32 %v251, 2147483648
        %v253 = vmul.f32 %v252, 1.442695
        %v254 = vpow.pop %v253
        %v255 = vadd.f32 %v254, 1.0
        %v256 = vrcp.pop %v255
        %v257 = vmul.f32 1.0, %v256
        %v258 = vtanh.pop %v251
        %260 = vrot.lane.b32.xlu0 %v192, 32
        %v261 = vpop.permute.xlu0 %260
        %v263 = vmul.f32 %v257, %v261
        %265 = vrot.lane.b32.xlu0 %v258, 64
        %v266 = vpop.permute.xlu0 %265
        %v268 = vmul.f32 %v257, %v266
        %270 = vrot.lane.b32.xlu0 %v268, 32
        %v271 = vpop.permute.xlu0 %270
        %v273 = vadd.f32 %v263, %v271
        %v274 = vtanh.pop %v273
        %276 = vrot.lane.b32.xlu0 %v274, 64
        %v277 = vpop.permute.xlu0 %276
        %v279 = vmul.f32 %v257, %v277
        %281 = vrot.lane.b32.xlu0 %v279, 32
        %v282 = vpop.permute.xlu0 %281
        %284 = vst.msk [vmem:[%s176] sm:$0xff] %vm207, %v282
        %s285 = scalar_lea.vmem %s152, 8 [#allocation4]
        %v286 = vld [vmem:[%s285] sm:$0xff]
        %v287 = vpack.c.bf16 %v279, %v279
        %289 = vrot.lane.b32.xlu0 %v287, 32
        %v290 = vpop.permute.xlu0 %289
        %v292 = vsel %vm207, %v290, 0
        %294 = vmatprep.subr.bf16.mxu0 0
        %295 = vmatpush1.bf16.msra.mxu0 %v203
        %296 = vmatprep.subr.bf16.mxu0 0
        %297 = vmatpush1.bf16.msra.mxu0 %v204
        %298 = vmatprep.subr.bf16.mxu0 0
        %299 = vmatpush1.bf16.msra.mxu0 0
        %300 = vmatprep.subr.bf16.mxu0 0
        %301 = vmatpush1.bf16.msra.mxu0 0
        %302 = vmatprep.subr.bf16.mxu0 0
        %303 = vmatpush1.bf16.msra.mxu0 0
        %304 = vmatprep.subr.bf16.mxu0 0
        %305 = vmatpush1.bf16.msra.mxu0 0
        %306 = vmatprep.subr.bf16.mxu0 0
        %307 = vmatpush1.bf16.msra.mxu0 0
        %308 = vmatprep.subr.bf16.mxu0 0
        %309 = vmatpush1.bf16.msra.mxu0 0
        %310 = vmatprep.subr.bf16.mxu0 0
        %311 = vmatpush1.bf16.msra.mxu0 0
        %312 = vmatprep.subr.bf16.mxu0 0
        %313 = vmatpush1.bf16.msra.mxu0 0
        %314 = vmatprep.subr.bf16.mxu0 0
        %315 = vmatpush1.bf16.msra.mxu0 0
        %316 = vmatprep.subr.bf16.mxu0 0
        %317 = vmatpush1.bf16.msra.mxu0 0
        %318 = vmatprep.subr.bf16.mxu0 0
        %319 = vmatpush1.bf16.msra.mxu0 0
        %320 = vmatprep.subr.bf16.mxu0 0
        %321 = vmatpush1.bf16.msra.mxu0 0
        %322 = vmatprep.subr.bf16.mxu0 0
        %323 = vmatpush1.bf16.msra.mxu0 0
        %324 = vmatprep.subr.bf16.mxu0 0
        %325 = vmatpush1.bf16.msra.mxu0 0
        %326 = vmatprep.mubr.bf16.mxu0 0
        %327 = vmatmul.mubr.bf16.gmra.mrb[0].mxu0 %v292
        %v328 = vpop.f32.mrb[0].mxu0
        %v329 = vadd.f32 0.0, %v328
        %v330 = vpop.f32.mrb[0].mxu0
        %v331 = vpop.f32.mrb[0].mxu0
        %v332 = vpop.f32.mrb[0].mxu0
        %333 = vdwg.mxu0
        %v334 = vadd.f32 %v286, %v329
        %v335 = vxor.u32 %v334, 2147483648
        %v336 = vmul.f32 %v335, 1.442695
        %v337 = vpow.pop %v336
        %v338 = vadd.f32 %v337, 1.0
        %v339 = vrcp.pop %v338
        %v340 = vmul.f32 1.0, %v339
        %v341 = vtanh.pop %v334
        %v342 = vmul.f32 %v340, %v273
        %344 = vrot.lane.b32.xlu0 %v341, 64
        %v345 = vpop.permute.xlu0 %344
        %v347 = vmul.f32 %v340, %v345
        %349 = vrot.lane.b32.xlu0 %v347, 32
        %v350 = vpop.permute.xlu0 %349
        %v352 = vadd.f32 %v342, %v350
        %v353 = vtanh.pop %v352
        %355 = vrot.lane.b32.xlu0 %v353, 64
        %v356 = vpop.permute.xlu0 %355
        %v358 = vmul.f32 %v340, %v356
        %360 = vrot.lane.b32.xlu0 %v358, 32
        %v361 = vpop.permute.xlu0 %360
        %s363 = scalar_lea.vmem %s176, 8 [#allocation9]
        %364 = vst.msk [vmem:[%s363] sm:$0xff] %vm207, %v361
        %s365 = scalar_lea.vmem %s152, 16 [#allocation4]
        %v366 = vld [vmem:[%s365] sm:$0xff]
        %v367 = vpack.c.bf16 %v358, %v358
        %369 = vrot.lane.b32.xlu0 %v367, 32
        %v370 = vpop.permute.xlu0 %369
        %v372 = vsel %vm207, %v370, 0
        %374 = vmatprep.subr.bf16.mxu0 0
        %375 = vmatpush1.bf16.msra.mxu0 %v203
        %376 = vmatprep.subr.bf16.mxu0 0
        %377 = vmatpush1.bf16.msra.mxu0 %v204
        %378 = vmatprep.subr.bf16.mxu0 0
        %379 = vmatpush1.bf16.msra.mxu0 0
        %380 = vmatprep.subr.bf16.mxu0 0
        %381 = vmatpush1.bf16.msra.mxu0 0
        %382 = vmatprep.subr.bf16.mxu0 0
        %383 = vmatpush1.bf16.msra.mxu0 0
        %384 = vmatprep.subr.bf16.mxu0 0
        %385 = vmatpush1.bf16.msra.mxu0 0
        %386 = vmatprep.subr.bf16.mxu0 0
        %387 = vmatpush1.bf16.msra.mxu0 0
        %388 = vmatprep.subr.bf16.mxu0 0
        %389 = vmatpush1.bf16.msra.mxu0 0
        %390 = vmatprep.subr.bf16.mxu0 0
        %391 = vmatpush1.bf16.msra.mxu0 0
        %392 = vmatprep.subr.bf16.mxu0 0
        %393 = vmatpush1.bf16.msra.mxu0 0
        %394 = vmatprep.subr.bf16.mxu0 0
        %395 = vmatpush1.bf16.msra.mxu0 0
        %396 = vmatprep.subr.bf16.mxu0 0
        %397 = vmatpush1.bf16.msra.mxu0 0
        %398 = vmatprep.subr.bf16.mxu0 0
        %399 = vmatpush1.bf16.msra.mxu0 0
        %400 = vmatprep.subr.bf16.mxu0 0
        %401 = vmatpush1.bf16.msra.mxu0 0
        %402 = vmatprep.subr.bf16.mxu0 0
        %403 = vmatpush1.bf16.msra.mxu0 0
        %404 = vmatprep.subr.bf16.mxu0 0
        %405 = vmatpush1.bf16.msra.mxu0 0
        %406 = vmatprep.mubr.bf16.mxu0 0
        %407 = vmatmul.mubr.bf16.gmra.mrb[0].mxu0 %v372
        %v408 = vpop.f32.mrb[0].mxu0
        %v409 = vadd.f32 0.0, %v408
        %v410 = vpop.f32.mrb[0].mxu0
        %v411 = vpop.f32.mrb[0].mxu0
        %v412 = vpop.f32.mrb[0].mxu0
        %413 = vdwg.mxu0
        %v414 = vadd.f32 %v366, %v409
        %v415 = vxor.u32 %v414, 2147483648
        %v416 = vmul.f32 %v415, 1.442695
        %v417 = vpow.pop %v416
        %v418 = vadd.f32 %v417, 1.0
        %v419 = vrcp.pop %v418
        %v420 = vmul.f32 1.0, %v419
        %v421 = vtanh.pop %v414
        %v422 = vmul.f32 %v420, %v352
        %424 = vrot.lane.b32.xlu0 %v421, 64
        %v425 = vpop.permute.xlu0 %424
        %v427 = vmul.f32 %v420, %v425
        %429 = vrot.lane.b32.xlu0 %v427, 32
        %v430 = vpop.permute.xlu0 %429
        %v432 = vadd.f32 %v422, %v430
        %v433 = vtanh.pop %v432
        %435 = vrot.lane.b32.xlu0 %v433, 64
        %v436 = vpop.permute.xlu0 %435
        %v438 = vmul.f32 %v420, %v436
        %440 = vrot.lane.b32.xlu0 %v438, 32
        %v441 = vpop.permute.xlu0 %440
        %s443 = scalar_lea.vmem %s176, 16 [#allocation9]
        %444 = vst.msk [vmem:[%s443] sm:$0xff] %vm207, %v441
        %s445 = scalar_lea.vmem %s152, 24 [#allocation4]
        %v446 = vld [vmem:[%s445] sm:$0xff]
        %v447 = vpack.c.bf16 %v438, %v438
        %449 = vrot.lane.b32.xlu0 %v447, 32
        %v450 = vpop.permute.xlu0 %449
        %v452 = vsel %vm207, %v450, 0
        %454 = vmatprep.subr.bf16.mxu0 0
        %455 = vmatpush1.bf16.msra.mxu0 %v203
        %456 = vmatprep.subr.bf16.mxu0 0
        %457 = vmatpush1.bf16.msra.mxu0 %v204
        %458 = vmatprep.subr.bf16.mxu0 0
        %459 = vmatpush1.bf16.msra.mxu0 0
        %460 = vmatprep.subr.bf16.mxu0 0
        %461 = vmatpush1.bf16.msra.mxu0 0
        %462 = vmatprep.subr.bf16.mxu0 0
        %463 = vmatpush1.bf16.msra.mxu0 0
        %464 = vmatprep.subr.bf16.mxu0 0
        %465 = vmatpush1.bf16.msra.mxu0 0
        %466 = vmatprep.subr.bf16.mxu0 0
        %467 = vmatpush1.bf16.msra.mxu0 0
        %468 = vmatprep.subr.bf16.mxu0 0
        %469 = vmatpush1.bf16.msra.mxu0 0
        %470 = vmatprep.subr.bf16.mxu0 0
        %471 = vmatpush1.bf16.msra.mxu0 0
        %472 = vmatprep.subr.bf16.mxu0 0
        %473 = vmatpush1.bf16.msra.mxu0 0
        %474 = vmatprep.subr.bf16.mxu0 0
        %475 = vmatpush1.bf16.msra.mxu0 0
        %476 = vmatprep.subr.bf16.mxu0 0
        %477 = vmatpush1.bf16.msra.mxu0 0
        %478 = vmatprep.subr.bf16.mxu0 0
        %479 = vmatpush1.bf16.msra.mxu0 0
        %480 = vmatprep.subr.bf16.mxu0 0
        %481 = vmatpush1.bf16.msra.mxu0 0
        %482 = vmatprep.subr.bf16.mxu0 0
        %483 = vmatpush1.bf16.msra.mxu0 0
        %484 = vmatprep.subr.bf16.mxu0 0
        %485 = vmatpush1.bf16.msra.mxu0 0
        %486 = vmatprep.mubr.bf16.mxu0 0
        %487 = vmatmul.mubr.bf16.gmra.mrb[0].mxu0 %v452
        %v488 = vpop.f32.mrb[0].mxu0
        %v489 = vadd.f32 0.0, %v488
        %v490 = vpop.f32.mrb[0].mxu0
        %v491 = vpop.f32.mrb[0].mxu0
        %v492 = vpop.f32.mrb[0].mxu0
        %493 = vdwg.mxu0
        %v494 = vadd.f32 %v446, %v489
        %v495 = vxor.u32 %v494, 2147483648
        %v496 = vmul.f32 %v495, 1.442695
        %v497 = vpow.pop %v496
        %v498 = vadd.f32 %v497, 1.0
        %v499 = vrcp.pop %v498
        %v500 = vmul.f32 1.0, %v499
        %v501 = vtanh.pop %v494
        %v502 = vmul.f32 %v500, %v432
        %504 = vrot.lane.b32.xlu0 %v501, 64
        %v505 = vpop.permute.xlu0 %504
        %v507 = vmul.f32 %v500, %v505
        %509 = vrot.lane.b32.xlu0 %v507, 32
        %v510 = vpop.permute.xlu0 %509
        %v512 = vadd.f32 %v502, %v510
        %v513 = vtanh.pop %v512
        %515 = vrot.lane.b32.xlu0 %v513, 64
        %v516 = vpop.permute.xlu0 %515
        %v518 = vmul.f32 %v500, %v516
        %520 = vrot.lane.b32.xlu0 %v518, 32
        %v521 = vpop.permute.xlu0 %520
        %s523 = scalar_lea.vmem %s176, 24 [#allocation9]
        %524 = vst.msk [vmem:[%s523] sm:$0xff] %vm207, %v521
        %525 = vst.msk [vmem:[#allocation2] sm:$0xff] %vm207, %v521
        %527 = vrot.lane.b32.xlu0 %v512, 96
        %v528 = vpop.permute.xlu0 %527
        %530 = vst.msk [vmem:[#allocation3] sm:$0xff] %vm207, %v528
        %s531 = sand.u32 %s75, 1
        %s532 = scalar_lea.sflag [#allocation6], %s531
        %s533 = sand.u32 %s75, 1
        %s534 = smul.addr %s533, 32
        %s535 = scalar_lea.vmem [#allocation9], %s534
        // Predicated region
        $region41: #{tpu_custom_call.1} parent=27 // pred_check
          %p536 = pneg %p85
        $region42: #{tpu_custom_call.1} parent=27 // pred_check_branch
          %538 = sbr.rel (%p536) target = $region44
        $region43: #{tpu_custom_call.1} parent=27 // pred_region
          %s539 = smul.u32 4, %s20
          %s541 = ssub.s32 512, 512
          %542 = vsyncadd %s532, %s541
          %s543 = smul.addr %s539, 128
          %s544 = scalar_lea.hbm %s2, %s543
          %s545 = sshll.u32 %s535, 4
          %s546 = int_to_ptr.vmem [resolvable:$true] %s545
          %551 = dma.vmem_to_hbm [thread:$0]  %s546, 512, %s544, %s532, 128, 128, 8
        $region44: #{tpu_custom_call.1} parent=27 // pred_fallthru
          _
      $region28: #{tpu_custom_call.1} parent=5 // pred_fallthru
        _
      %p552 = scmp.le.s32.totalorder 2, %s15
      // Predicated region
      $region45: #{tpu_custom_call.1} parent=5 // pred_check
        %p553 = pneg %p552
      $region46: #{tpu_custom_call.1} parent=5 // pred_check_branch
        %555 = sbr.rel (%p553) target = $region48
      $region47: #{tpu_custom_call.1} parent=5 // pred_region
        %s556 = ssub.s32 %s15, 2
        // Predicated region
        $region49: #{tpu_custom_call.1} parent=47 // pred_check
          %p557 = pneg %p91
        $region50: #{tpu_custom_call.1} parent=47 // pred_check_branch
          %559 = sbr.rel (%p557) target = $region52
        $region51: #{tpu_custom_call.1} parent=47 // pred_region
          %s560 = sand.u32 %s76, 1
          %s561 = scalar_lea.sflag [#allocation6], %s560
          %s562 = sand.u32 %s76, 1
          %s563 = smul.addr %s562, 32
          %s564 = scalar_lea.vmem [#allocation9], %s563
          %565 = dma.done %s561, 512
        $region52: #{tpu_custom_call.1} parent=47 // pred_fallthru
          _
      $region48: #{tpu_custom_call.1} parent=5 // pred_fallthru
        _
    $region6: #{tpu_custom_call.1} parent=1 // loop_footer
      %s19 = sadd.s32 1, %s15
    $region7: #{tpu_custom_call.1} parent=1 // loop_footer_branch
      %14 = sbr.rel target = $region3
    $region8: #{tpu_custom_call.1} parent=1 // loop_exit
      _
    %566 = vsyncpa [#allocation5], 1
    %s567 = scalar_lea.sflag [#allocation5], 1
    %568 = vsyncpa %s567, 1
    %569 = vsyncpa [#allocation8], 1
    %570 = vsyncpa [#allocation6], 1
    %s571 = scalar_lea.sflag [#allocation6], 1
    %572 = vsyncpa %s571, 1

</llo_original>
